<compile_context>
chip_gen: v6e
topology: v6e:2x2x1
jax: 0.10.0
libtpu: 0.0.40
codegen_flags: <defaults>
</compile_context>

<pallas_src>
import functools

import jax
import jax.numpy as jnp
from jax import lax
from jax.experimental import pallas as pl
from jax.experimental.pallas import tpu as pltpu


def _make_kernel(*, tile_b, in_chan, out_chan, size_kern, W, HW, HWP, HoW,
                 compute_dtype):
    kk = size_kern

    def kernel(x_ref, w_ref, b_ref, o_ref, xpad_ref):
        # x_ref   : (tile_b, C, H*W)   input images, natural layout (no im2col)
        # w_ref   : (k*k, N, C)        one (N, C) weight slab per conv tap
        # b_ref   : (N, 1)             f32 bias
        # o_ref   : (tile_b, N, Ho*W)  padded-width output, lane-major
        # xpad_ref: (C, HWP)           VMEM scratch: staged image + tail pad
        if HWP > HW:
            # The pad tail only ever feeds the discarded j >= Wo output
            # columns; zero it so those columns stay finite / deterministic.
            xpad_ref[:, HW:] = jnp.zeros((in_chan, HWP - HW), xpad_ref.dtype)
        bias = b_ref[...]                                    # (N, 1) f32
        for bb in range(tile_b):                             # static unroll
            # In-kernel im2col: stage this image once in VMEM; every shifted
            # window below is a static lane-slice of this scratch.
            xpad_ref[:, :HW] = x_ref[bb]
            acc = jnp.zeros((out_chan, HoW), jnp.float32)
            for k1 in range(kk):
                for k2 in range(kk):
                    s = k1 * W + k2                          # static shift
                    xs = xpad_ref[:, s:s + HoW].astype(compute_dtype)
                    acc = acc + jnp.dot(w_ref[k1 * kk + k2], xs,
                                        preferred_element_type=jnp.float32)
            o_ref[bb] = (acc + bias).astype(o_ref.dtype)

    return kernel


@functools.partial(
    jax.jit,
    static_argnames=("size_in", "size_kern", "in_chan", "out_chan",
                     "compute_dtype", "tile_b"),
)
def linear_cnn_forward(x, weight_flat, bias, *, size_in, size_kern, in_chan,
                       out_chan, compute_dtype=jnp.bfloat16, tile_b=8):
    B = x.shape[0]
    H = W = size_in
    Ho = Wo = size_in - size_kern + 1
    HW = H * W
    HoW = Ho * W          # padded-width output row length (lane dimension)
    # Scratch length: the largest shifted-window read touches index
    #   (Ho*W - 1) + (k-1)*W + (k-1)  ->  need HW + (k-1)*(W+1) lanes.
    HWP = HW + (size_kern - 1) * (W + 1)
    HWP = -(-HWP // 128) * 128            # round lanes up to a multiple of 128

    # Batch tile: amortizes per-grid-step overhead at large B, but keep at
    # least 2 grid steps so v7x's two TensorCores both get work.
    tb = max(1, min(int(tile_b), B))
    if B >= 2:
        tb = max(1, min(tb, B // 2))
    while B % tb:
        tb -= 1
    grid = (B // tb,)

    # Wrapper glue is layout-only and tiny: NO im2col, NO x copy, NO x cast.
    x3 = x.reshape(B, in_chan, HW)                           # free reshape
    w = weight_flat.reshape(out_chan, in_chan, size_kern, size_kern)
    w = jnp.transpose(w, (2, 3, 0, 1)).reshape(
        size_kern * size_kern, out_chan, in_chan).astype(compute_dtype)
    b2 = bias.reshape(out_chan, 1).astype(jnp.float32)

    kernel = _make_kernel(tile_b=tb, in_chan=in_chan, out_chan=out_chan,
                          size_kern=size_kern, W=W, HW=HW, HWP=HWP, HoW=HoW,
                          compute_dtype=compute_dtype)

    cost = pl.CostEstimate(
        flops=2 * B * out_chan * in_chan * size_kern * size_kern * Ho * W,
        transcendentals=0,
        bytes_accessed=(x3.size * x3.dtype.itemsize
                        + w.size * w.dtype.itemsize
                        + b2.size * 4 + B * out_chan * HoW * 4))

    # Per-step VMEM footprint (double-buffered in/out blocks + scratch):
    #   2*tb*C*HW*4 + 2*tb*N*HoW*4 + C*HWP*4 + k^2*N*C*itemsize  bytes
    # (a few tens of KiB here).  Re-derive against v7x's 32 MiB scoped /
    # 64 MiB physical VMEM before raising tile_b or the image size.
    out_p = pl.pallas_call(
        kernel,
        out_shape=jax.ShapeDtypeStruct((B, out_chan, HoW), jnp.float32),
        grid=grid,
        in_specs=[
            pl.BlockSpec((tb, in_chan, HW), lambda g: (g, 0, 0)),
            pl.BlockSpec((size_kern * size_kern, out_chan, in_chan),
                         lambda g: (0, 0, 0)),               # weights resident
            pl.BlockSpec((out_chan, 1), lambda g: (0, 0)),   # bias resident
        ],
        out_specs=pl.BlockSpec((tb, out_chan, HoW), lambda g: (g, 0, 0)),
        scratch_shapes=[pltpu.VMEM((in_chan, HWP), x3.dtype)],
        compiler_params=pltpu.CompilerParams(
            dimension_semantics=("parallel",)),
        cost_estimate=cost,
    )(x3, w, b2)

    # (B, N, Ho*W) -> (B, N, Ho, W) is a free reshape; drop the throwaway
    # j >= Wo columns (one small, output-sized slice).
    # TODO(synk): fold this slice into the kernel with per-row stores into a
    # (B, N, Ho, Wo) block if the output ever becomes large enough to matter.
    out = out_p.reshape(B, out_chan, Ho, W)[:, :, :, :Wo]
    return out.astype(x.dtype)


if __name__ == "__main__":
    size_in, size_kern = 16, 3
    in_chan, out_chan = 4, 8
    batch = 2
    size_out = size_in - size_kern + 1

    key = jax.random.PRNGKey(0)
    kx, kw, kx2 = jax.random.split(key, 3)

    x = jax.random.normal(kx, (batch, in_chan, size_in, size_in),
                          dtype=jnp.float32)

    # Parameter init with the LinearCNNLayer shapes: flattened Conv2d weight
    # (out_chan*in_chan*k*k,) and zero bias (out_chan,).
    fan_in = in_chan * size_kern * size_kern
    bound = 1.0 / (fan_in ** 0.5)
    weight_flat = jax.random.uniform(
        kw, (out_chan * fan_in,), minval=-bound, maxval=bound,
        dtype=jnp.float32)
    bias = jnp.zeros((out_chan,), dtype=jnp.float32)

    # Reference: valid stride-1 conv (same semantics as the module's sparse mm).
    def conv_ref(xa):
        w4d = weight_flat.reshape(out_chan, in_chan, size_kern, size_kern)
        y = lax.conv_general_dilated(
            xa, w4d, window_strides=(1, 1), padding="VALID",
            dimension_numbers=("NCHW", "OIHW", "NCHW"))
        return y + bias[None, :, None, None]

    y_ref = conv_ref(x)

    # f32 compute path: tight correctness check of the kernel math + layout.
    y_f32 = linear_cnn_forward(
        x, weight_flat, bias, size_in=size_in, size_kern=size_kern,
        in_chan=in_chan, out_chan=out_chan, compute_dtype=jnp.float32)
    y_f32 = jax.block_until_ready(y_f32)
    assert y_f32.shape == (batch, out_chan, size_out, size_out)
    assert jnp.allclose(y_f32, y_ref, atol=1e-4, rtol=1e-4)

    # bf16-on-MXU path (the production configuration).
    y_bf16 = linear_cnn_forward(
        x, weight_flat, bias, size_in=size_in, size_kern=size_kern,
        in_chan=in_chan, out_chan=out_chan, compute_dtype=jnp.bfloat16)
    y_bf16 = jax.block_until_ready(y_bf16)
    assert y_bf16.shape == (batch, out_chan, size_out, size_out)
    assert jnp.allclose(y_bf16, y_ref, atol=5e-2, rtol=5e-2)

    # Larger batch exercises the tile_b > 1 (multi-image per grid step) path.
    x4 = jax.random.normal(kx2, (4, in_chan, size_in, size_in),
                           dtype=jnp.float32)
    y4 = linear_cnn_forward(
        x4, weight_flat, bias, size_in=size_in, size_kern=size_kern,
        in_chan=in_chan, out_chan=out_chan, compute_dtype=jnp.float32)
    y4 = jax.block_until_ready(y4)
    assert jnp.allclose(y4, conv_ref(x4), atol=1e-4, rtol=1e-4)

    print("KERNEL_OK")
</pallas_src>

<mosaic_0001>
module attributes {stable_mosaic.version = 11 : i64} {
  func.func @kernel(%arg0: i32, %arg1: memref<1x4x256xf32, #tpu.memory_space<vmem>>, %arg2: memref<9x8x4xf32, #tpu.memory_space<vmem>>, %arg3: memref<8x1xf32, #tpu.memory_space<vmem>>, %arg4: memref<1x8x224xf32, #tpu.memory_space<vmem>>, %arg5: memref<4x384xf32, #tpu.memory_space<vmem>>) attributes {dimension_semantics = [#tpu.dimension_semantics<parallel>], iteration_bounds = array<i64: 2>, scalar_prefetch = 0 : i64, scratch_operands = 1 : i64, tpu.core_type = #tpu.core_type<tc>, window_params = [{transform_indices = @transform_0, window_bounds = array<i64: 1, 4, 256>}, {pipeline_mode = #tpu.pipeline_mode<synchronous>, transform_indices = @transform_1, window_bounds = array<i64: 9, 8, 4>}, {pipeline_mode = #tpu.pipeline_mode<synchronous>, transform_indices = @transform_2, window_bounds = array<i64: 8, 1>}, {transform_indices = @transform_3, window_bounds = array<i64: 1, 8, 224>}]} {
    %cst = arith.constant 0.000000e+00 : f32
    %0 = vector.broadcast %cst : f32 to vector<4x128xf32>
    %c0 = arith.constant 0 : index
    %c256 = arith.constant 256 : index
    %1 = vector.load %arg5[%c0, %c256] : memref<4x384xf32, #tpu.memory_space<vmem>>, vector<4x128xf32>
    tpu.vector_store %arg5[%c0, %c256], %0 {strides = array<i32>} : memref<4x384xf32, #tpu.memory_space<vmem>>, vector<4x128xf32>,
    %c0_0 = arith.constant 0 : index
    %c0_1 = arith.constant 0 : index
    %2 = vector.load %arg3[%c0_0, %c0_1] : memref<8x1xf32, #tpu.memory_space<vmem>>, vector<8x1xf32>
    %c0_2 = arith.constant 0 : index
    %c0_3 = arith.constant 0 : index
    %c0_4 = arith.constant 0 : index
    %3 = vector.load %arg1[%c0_2, %c0_3, %c0_4] : memref<1x4x256xf32, #tpu.memory_space<vmem>>, vector<1x4x256xf32>
    %4 = vector.shape_cast %3 : vector<1x4x256xf32> to vector<4x256xf32>
    %c0_5 = arith.constant 0 : index
    %c0_6 = arith.constant 0 : index
    %5 = vector.load %arg5[%c0_5, %c0_6] : memref<4x384xf32, #tpu.memory_space<vmem>>, vector<4x256xf32>
    tpu.vector_store %arg5[%c0_5, %c0_6], %4 {strides = array<i32>} : memref<4x384xf32, #tpu.memory_space<vmem>>, vector<4x256xf32>,
    %cst_7 = arith.constant 0.000000e+00 : f32
    %6 = vector.broadcast %cst_7 : f32 to vector<8x224xf32>
    %c0_8 = arith.constant 0 : index
    %c0_9 = arith.constant 0 : index
    %7 = vector.load %arg5[%c0_8, %c0_9] : memref<4x384xf32, #tpu.memory_space<vmem>>, vector<4x224xf32>
    %c0_10 = arith.constant 0 : index
    %c0_11 = arith.constant 0 : index
    %c0_12 = arith.constant 0 : index
    %8 = vector.load %arg2[%c0_10, %c0_11, %c0_12] : memref<9x8x4xf32, #tpu.memory_space<vmem>>, vector<1x8x4xf32>
    %9 = vector.shape_cast %8 : vector<1x8x4xf32> to vector<8x4xf32>
    %cst_13 = arith.constant dense<0.000000e+00> : vector<8x224xf32>
    %10 = tpu.matmul %9, %7, %cst_13 {dimension_numbers = #tpu.dot_dimension_numbers<[1], [0], [0], [1], [0, 0, 1, 1], [], []>} : vector<8x4xf32>, vector<4x224xf32>, vector<8x224xf32> -> vector<8x224xf32>
    %11 = arith.addf %6, %10 : vector<8x224xf32>
    %c0_14 = arith.constant 0 : index
    %c1 = arith.constant 1 : index
    %12 = vector.load %arg5[%c0_14, %c1] : memref<4x384xf32, #tpu.memory_space<vmem>>, vector<4x224xf32>
    %c1_15 = arith.constant 1 : index
    %c0_16 = arith.constant 0 : index
    %c0_17 = arith.constant 0 : index
    %13 = vector.load %arg2[%c1_15, %c0_16, %c0_17] : memref<9x8x4xf32, #tpu.memory_space<vmem>>, vector<1x8x4xf32>
    %14 = vector.shape_cast %13 : vector<1x8x4xf32> to vector<8x4xf32>
    %cst_18 = arith.constant dense<0.000000e+00> : vector<8x224xf32>
    %15 = tpu.matmul %14, %12, %cst_18 {dimension_numbers = #tpu.dot_dimension_numbers<[1], [0], [0], [1], [0, 0, 1, 1], [], []>} : vector<8x4xf32>, vector<4x224xf32>, vector<8x224xf32> -> vector<8x224xf32>
    %16 = arith.addf %11, %15 : vector<8x224xf32>
    %c0_19 = arith.constant 0 : index
    %c2 = arith.constant 2 : index
    %17 = vector.load %arg5[%c0_19, %c2] : memref<4x384xf32, #tpu.memory_space<vmem>>, vector<4x224xf32>
    %c2_20 = arith.constant 2 : index
    %c0_21 = arith.constant 0 : index
    %c0_22 = arith.constant 0 : index
    %18 = vector.load %arg2[%c2_20, %c0_21, %c0_22] : memref<9x8x4xf32, #tpu.memory_space<vmem>>, vector<1x8x4xf32>
    %19 = vector.shape_cast %18 : vector<1x8x4xf32> to vector<8x4xf32>
    %cst_23 = arith.constant dense<0.000000e+00> : vector<8x224xf32>
    %20 = tpu.matmul %19, %17, %cst_23 {dimension_numbers = #tpu.dot_dimension_numbers<[1], [0], [0], [1], [0, 0, 1, 1], [], []>} : vector<8x4xf32>, vector<4x224xf32>, vector<8x224xf32> -> vector<8x224xf32>
    %21 = arith.addf %16, %20 : vector<8x224xf32>
    %c0_24 = arith.constant 0 : index
    %c16 = arith.constant 16 : index
    %22 = vector.load %arg5[%c0_24, %c16] : memref<4x384xf32, #tpu.memory_space<vmem>>, vector<4x224xf32>
    %c3 = arith.constant 3 : index
    %c0_25 = arith.constant 0 : index
    %c0_26 = arith.constant 0 : index
    %23 = vector.load %arg2[%c3, %c0_25, %c0_26] : memref<9x8x4xf32, #tpu.memory_space<vmem>>, vector<1x8x4xf32>
    %24 = vector.shape_cast %23 : vector<1x8x4xf32> to vector<8x4xf32>
    %cst_27 = arith.constant dense<0.000000e+00> : vector<8x224xf32>
    %25 = tpu.matmul %24, %22, %cst_27 {dimension_numbers = #tpu.dot_dimension_numbers<[1], [0], [0], [1], [0, 0, 1, 1], [], []>} : vector<8x4xf32>, vector<4x224xf32>, vector<8x224xf32> -> vector<8x224xf32>
    %26 = arith.addf %21, %25 : vector<8x224xf32>
    %c0_28 = arith.constant 0 : index
    %c17 = arith.constant 17 : index
    %27 = vector.load %arg5[%c0_28, %c17] : memref<4x384xf32, #tpu.memory_space<vmem>>, vector<4x224xf32>
    %c4 = arith.constant 4 : index
    %c0_29 = arith.constant 0 : index
    %c0_30 = arith.constant 0 : index
    %28 = vector.load %arg2[%c4, %c0_29, %c0_30] : memref<9x8x4xf32, #tpu.memory_space<vmem>>, vector<1x8x4xf32>
    %29 = vector.shape_cast %28 : vector<1x8x4xf32> to vector<8x4xf32>
    %cst_31 = arith.constant dense<0.000000e+00> : vector<8x224xf32>
    %30 = tpu.matmul %29, %27, %cst_31 {dimension_numbers = #tpu.dot_dimension_numbers<[1], [0], [0], [1], [0, 0, 1, 1], [], []>} : vector<8x4xf32>, vector<4x224xf32>, vector<8x224xf32> -> vector<8x224xf32>
    %31 = arith.addf %26, %30 : vector<8x224xf32>
    %c0_32 = arith.constant 0 : index
    %c18 = arith.constant 18 : index
    %32 = vector.load %arg5[%c0_32, %c18] : memref<4x384xf32, #tpu.memory_space<vmem>>, vector<4x224xf32>
    %c5 = arith.constant 5 : index
    %c0_33 = arith.constant 0 : index
    %c0_34 = arith.constant 0 : index
    %33 = vector.load %arg2[%c5, %c0_33, %c0_34] : memref<9x8x4xf32, #tpu.memory_space<vmem>>, vector<1x8x4xf32>
    %34 = vector.shape_cast %33 : vector<1x8x4xf32> to vector<8x4xf32>
    %cst_35 = arith.constant dense<0.000000e+00> : vector<8x224xf32>
    %35 = tpu.matmul %34, %32, %cst_35 {dimension_numbers = #tpu.dot_dimension_numbers<[1], [0], [0], [1], [0, 0, 1, 1], [], []>} : vector<8x4xf32>, vector<4x224xf32>, vector<8x224xf32> -> vector<8x224xf32>
    %36 = arith.addf %31, %35 : vector<8x224xf32>
    %c0_36 = arith.constant 0 : index
    %c32 = arith.constant 32 : index
    %37 = vector.load %arg5[%c0_36, %c32] : memref<4x384xf32, #tpu.memory_space<vmem>>, vector<4x224xf32>
    %c6 = arith.constant 6 : index
    %c0_37 = arith.constant 0 : index
    %c0_38 = arith.constant 0 : index
    %38 = vector.load %arg2[%c6, %c0_37, %c0_38] : memref<9x8x4xf32, #tpu.memory_space<vmem>>, vector<1x8x4xf32>
    %39 = vector.shape_cast %38 : vector<1x8x4xf32> to vector<8x4xf32>
    %cst_39 = arith.constant dense<0.000000e+00> : vector<8x224xf32>
    %40 = tpu.matmul %39, %37, %cst_39 {dimension_numbers = #tpu.dot_dimension_numbers<[1], [0], [0], [1], [0, 0, 1, 1], [], []>} : vector<8x4xf32>, vector<4x224xf32>, vector<8x224xf32> -> vector<8x224xf32>
    %41 = arith.addf %36, %40 : vector<8x224xf32>
    %c0_40 = arith.constant 0 : index
    %c33 = arith.constant 33 : index
    %42 = vector.load %arg5[%c0_40, %c33] : memref<4x384xf32, #tpu.memory_space<vmem>>, vector<4x224xf32>
    %c7 = arith.constant 7 : index
    %c0_41 = arith.constant 0 : index
    %c0_42 = arith.constant 0 : index
    %43 = vector.load %arg2[%c7, %c0_41, %c0_42] : memref<9x8x4xf32, #tpu.memory_space<vmem>>, vector<1x8x4xf32>
    %44 = vector.shape_cast %43 : vector<1x8x4xf32> to vector<8x4xf32>
    %cst_43 = arith.constant dense<0.000000e+00> : vector<8x224xf32>
    %45 = tpu.matmul %44, %42, %cst_43 {dimension_numbers = #tpu.dot_dimension_numbers<[1], [0], [0], [1], [0, 0, 1, 1], [], []>} : vector<8x4xf32>, vector<4x224xf32>, vector<8x224xf32> -> vector<8x224xf32>
    %46 = arith.addf %41, %45 : vector<8x224xf32>
    %c0_44 = arith.constant 0 : index
    %c34 = arith.constant 34 : index
    %47 = vector.load %arg5[%c0_44, %c34] : memref<4x384xf32, #tpu.memory_space<vmem>>, vector<4x224xf32>
    %c8 = arith.constant 8 : index
    %c0_45 = arith.constant 0 : index
    %c0_46 = arith.constant 0 : index
    %48 = vector.load %arg2[%c8, %c0_45, %c0_46] : memref<9x8x4xf32, #tpu.memory_space<vmem>>, vector<1x8x4xf32>
    %49 = vector.shape_cast %48 : vector<1x8x4xf32> to vector<8x4xf32>
    %cst_47 = arith.constant dense<0.000000e+00> : vector<8x224xf32>
    %50 = tpu.matmul %49, %47, %cst_47 {dimension_numbers = #tpu.dot_dimension_numbers<[1], [0], [0], [1], [0, 0, 1, 1], [], []>} : vector<8x4xf32>, vector<4x224xf32>, vector<8x224xf32> -> vector<8x224xf32>
    %51 = arith.addf %46, %50 : vector<8x224xf32>
    %52 = vector.broadcast %2 : vector<8x1xf32> to vector<8x224xf32>
    %53 = arith.addf %51, %52 : vector<8x224xf32>
    %c0_48 = arith.constant 0 : index
    %c0_49 = arith.constant 0 : index
    %c0_50 = arith.constant 0 : index
    %54 = vector.load %arg4[%c0_48, %c0_49, %c0_50] : memref<1x8x224xf32, #tpu.memory_space<vmem>>, vector<1x8x224xf32>
    %55 = vector.shape_cast %54 : vector<1x8x224xf32> to vector<8x224xf32>
    %56 = vector.shape_cast %53 : vector<8x224xf32> to vector<1x8x224xf32>
    tpu.vector_store %arg4[%c0_48, %c0_49, %c0_50], %56 {strides = array<i32>} : memref<1x8x224xf32, #tpu.memory_space<vmem>>, vector<1x8x224xf32>,
    return
  }
  func.func @transform_0(%arg0: i32) -> (i32, i32, i32) {
    %c0_i32 = arith.constant 0 : i32
    %c0_i32_0 = arith.constant 0 : i32
    %c0_i32_1 = arith.constant 0 : i32
    return %arg0, %c0_i32, %c0_i32_0 : i32, i32, i32
  }
  func.func @transform_1(%arg0: i32) -> (i32, i32, i32) {
    %c0_i32 = arith.constant 0 : i32
    %c0_i32_0 = arith.constant 0 : i32
    %c0_i32_1 = arith.constant 0 : i32
    %c0_i32_2 = arith.constant 0 : i32
    return %c0_i32, %c0_i32_0, %c0_i32_1 : i32, i32, i32
  }
  func.func @transform_2(%arg0: i32) -> (i32, i32) {
    %c0_i32 = arith.constant 0 : i32
    %c0_i32_0 = arith.constant 0 : i32
    %c0_i32_1 = arith.constant 0 : i32
    return %c0_i32, %c0_i32_0 : i32, i32
  }
  func.func @transform_3(%arg0: i32) -> (i32, i32, i32) {
    %c0_i32 = arith.constant 0 : i32
    %c0_i32_0 = arith.constant 0 : i32
    %c0_i32_1 = arith.constant 0 : i32
    return %arg0, %c0_i32, %c0_i32_0 : i32, i32, i32
  }
}

</mosaic_0001>

<llo_original>
// kernel: linear_cnn_forward.1
$region0: #{linear_cnn_forward.1}
  #allocation0 [shape = 'u32[]', space=smem, size = 0x4, offset = 0x4, fixed_abs, tag = 'smem constant byte address 0x4 - core index']
  #allocation1 [shape = 'u32[144,128]{1,0:T(1,128)}', space=vmem, size = 0x12000, scoped, tag = 'internal scratch']
  #allocation2 [shape = 'f32[4,384]{1,0:T(4,128)}', space=vmem, size = 0x1800, scoped, tag = 'scratch operand']
  %s0 = inlined_call_operand.vmem [shape: f32[2,4,256], index: 0, kind: input, shape index: {}]
  %s1 = inlined_call_operand.vmem [shape: f32[9,8,4], index: 1, kind: input, shape index: {}]
  %s2 = inlined_call_operand.vmem [shape: f32[8,1], index: 2, kind: input, shape index: {}]
  %s3 = inlined_call_operand.vmem [shape: f32[2,8,224], index: 3, kind: output, shape index: {}]
  %s4 = sld [smem:[#allocation0]]
  $region45: #{linear_cnn_forward.1} parent=0
    _
  %s6 = ssub.s32 1, %s4
  %s7 = scalar_select 0, %s6, %s4
  loop: start=0, step=1, limit=4
  $region2: #{linear_cnn_forward.1} parent=0 // loop_pre_header
    _
  $region3: #{linear_cnn_forward.1} parent=0 // loop_header
    %s9 = sphi 0, %s13
    %p10 = scmp.ge.s32.totalorder %s9, 4
    %s19 = sphi 0, %s21
    %s22 = sphi 0, %s19
    %s23 = sphi 0, %s22
    %s39 = sphi 0, %s23
    %s43 = sphi 0, %s43
    %s45 = sphi 0, %s43
    %s46 = sphi 0, %s45
    %s60 = sphi 0, %s46
    %s64 = sphi 0, %s64
    %s66 = sphi 0, %s64
    %s67 = sphi 0, %s66
    %s81 = sphi 0, %s67
    %s87 = sphi 0, %s89
    %s90 = sphi 0, %s87
    %s91 = sphi 0, %s90
    %s107 = sphi 0, %s91
  $region4: #{linear_cnn_forward.1} parent=0 // loop_header_branch
    %12 = sbr.rel (%p10) target = $region8
  $region5: #{linear_cnn_forward.1} parent=0 // loop_body
    %s14 = ssub.s32 %s9, 1
    %s15 = ssub.s32 %s9, 2
    %s16 = sadd.s32 %s9, 1
    %s17 = ssub.s32 %s9, %s16
    %p18 = scmp.eq.s32.totalorder %s17, 0
    %s20 = sadd.s32 %s19, 1
    %s21 = scalar_select %p18, %s19, %s20
    %p24 = pneg %p18
    %p25 = scmp.eq.s32.totalorder %s9, 1
    %p26 = por %p24, %p25
    %p27 = scmp.ne.s32.totalorder %s19, %s22
    %p28 = scmp.eq.s32.totalorder %s9, 0
    %p29 = por %p27, %p28
    %p30 = scmp.ne.s32.totalorder %s19, %s22
    %p31 = scmp.eq.s32.totalorder %s14, 1
    %p32 = por %p30, %p31
    %p33 = scmp.ne.s32.totalorder %s22, %s23
    %p34 = scmp.eq.s32.totalorder %s14, 0
    %p35 = por %p33, %p34
    %p36 = scmp.ne.s32.totalorder %s22, %s23
    %p37 = scmp.eq.s32.totalorder %s15, 1
    %p38 = por %p36, %p37
    %p40 = scmp.ne.s32.totalorder %s23, %s39
    %p41 = scmp.eq.s32.totalorder %s15, 0
    %p42 = por %p40, %p41
    %s44 = sadd.s32 %s43, 1
    %p47 = scmp.eq.s32.totalorder %s9, 1
    %p48 = scmp.ne.s32.totalorder %s43, %s45
    %p49 = scmp.eq.s32.totalorder %s9, 0
    %p50 = por %p48, %p49
    %p51 = scmp.ne.s32.totalorder %s43, %s45
    %p52 = scmp.eq.s32.totalorder %s14, 1
    %p53 = por %p51, %p52
    %p54 = scmp.ne.s32.totalorder %s45, %s46
    %p55 = scmp.eq.s32.totalorder %s14, 0
    %p56 = por %p54, %p55
    %p57 = scmp.ne.s32.totalorder %s45, %s46
    %p58 = scmp.eq.s32.totalorder %s15, 1
    %p59 = por %p57, %p58
    %p61 = scmp.ne.s32.totalorder %s46, %s60
    %p62 = scmp.eq.s32.totalorder %s15, 0
    %p63 = por %p61, %p62
    %s65 = sadd.s32 %s64, 1
    %p68 = scmp.eq.s32.totalorder %s9, 1
    %p69 = scmp.ne.s32.totalorder %s64, %s66
    %p70 = scmp.eq.s32.totalorder %s9, 0
    %p71 = por %p69, %p70
    %p72 = scmp.ne.s32.totalorder %s64, %s66
    %p73 = scmp.eq.s32.totalorder %s14, 1
    %p74 = por %p72, %p73
    %p75 = scmp.ne.s32.totalorder %s66, %s67
    %p76 = scmp.eq.s32.totalorder %s14, 0
    %p77 = por %p75, %p76
    %p78 = scmp.ne.s32.totalorder %s66, %s67
    %p79 = scmp.eq.s32.totalorder %s15, 1
    %p80 = por %p78, %p79
    %p82 = scmp.ne.s32.totalorder %s67, %s81
    %p83 = scmp.eq.s32.totalorder %s15, 0
    %p84 = por %p82, %p83
    %s85 = ssub.s32 %s9, %s16
    %p86 = scmp.eq.s32.totalorder %s85, 0
    %s88 = sadd.s32 %s87, 1
    %s89 = scalar_select %p86, %s87, %s88
    %p92 = pneg %p86
    %p93 = scmp.eq.s32.totalorder %s9, 1
    %p94 = por %p92, %p93
    %p95 = scmp.ne.s32.totalorder %s87, %s90
    %p96 = scmp.eq.s32.totalorder %s9, 0
    %p97 = por %p95, %p96
    %p98 = scmp.ne.s32.totalorder %s87, %s90
    %p99 = scmp.eq.s32.totalorder %s14, 1
    %p100 = por %p98, %p99
    %p101 = scmp.ne.s32.totalorder %s90, %s91
    %p102 = scmp.eq.s32.totalorder %s14, 0
    %p103 = por %p101, %p102
    %p104 = scmp.ne.s32.totalorder %s90, %s91
    %p105 = scmp.eq.s32.totalorder %s15, 1
    %p106 = por %p104, %p105
    %p108 = scmp.ne.s32.totalorder %s91, %s107
    %p109 = scmp.eq.s32.totalorder %s15, 0
    %p110 = por %p108, %p109
    %p111 = scmp.le.s32.totalorder 1, %s9
    %p112 = scmp.lt.s32.totalorder %s9, 3
    %p113 = pnand %p111, %p112
    %p114 = pneg %p113
    // Predicated region
    $region9: #{linear_cnn_forward.1} parent=5 // pred_check
      _
    $region10: #{linear_cnn_forward.1} parent=5 // pred_check_branch
      %116 = sbr.rel (%p113) target = $region12
    $region11: #{linear_cnn_forward.1} parent=5 // pred_region
      %s117 = ssub.s32 %s9, 1
      // Predicated region
      $region13: #{linear_cnn_forward.1} parent=11 // pred_check
        %p118 = pneg %p56
      $region14: #{linear_cnn_forward.1} parent=11 // pred_check_branch
        %120 = sbr.rel (%p118) target = $region16
      $region15: #{linear_cnn_forward.1} parent=11 // pred_region
        _
      $region16: #{linear_cnn_forward.1} parent=11 // pred_fallthru
        _
      // Predicated region
      $region17: #{linear_cnn_forward.1} parent=11 // pred_check
        %p121 = pneg %p77
      $region18: #{linear_cnn_forward.1} parent=11 // pred_check_branch
        %123 = sbr.rel (%p121) target = $region20
      $region19: #{linear_cnn_forward.1} parent=11 // pred_region
        _
      $region20: #{linear_cnn_forward.1} parent=11 // pred_fallthru
        _
    $region12: #{linear_cnn_forward.1} parent=5 // pred_fallthru
      _
    %p124 = scmp.lt.s32.totalorder %s9, 2
    // Predicated region
    $region21: #{linear_cnn_forward.1} parent=5 // pred_check
      %p125 = pneg %p124
    $region22: #{linear_cnn_forward.1} parent=5 // pred_check_branch
      %127 = sbr.rel (%p125) target = $region24
    $region23: #{linear_cnn_forward.1} parent=5 // pred_region
      // Predicated region
      $region25: #{linear_cnn_forward.1} parent=23 // pred_check
        %p128 = pneg %p29
      $region26: #{linear_cnn_forward.1} parent=23 // pred_check_branch
        %130 = sbr.rel (%p128) target = $region28
      $region27: #{linear_cnn_forward.1} parent=23 // pred_region
        %p131 = scmp.lt.s32.totalorder %s9, 1
        %s132 = scalar_select %p131, %s9, 1
        %s133 = smul.addr %s132, 2
        %s134 = smul.addr %s133, 4
        %s135 = scalar_lea.vmem %s0, %s134
      $region28: #{linear_cnn_forward.1} parent=23 // pred_fallthru
        _
    $region24: #{linear_cnn_forward.1} parent=5 // pred_fallthru
      _
    %p136 = scmp.le.s32.totalorder 1, %s9
    %p137 = scmp.lt.s32.totalorder %s9, 3
    %p138 = pnand %p136, %p137
    %p139 = pneg %p138
    // Predicated region
    $region29: #{linear_cnn_forward.1} parent=5 // pred_check
      _
    $region30: #{linear_cnn_forward.1} parent=5 // pred_check_branch
      %141 = sbr.rel (%p138) target = $region32
    $region31: #{linear_cnn_forward.1} parent=5 // pred_region
      %s142 = ssub.s32 %s9, 1
      %p143 = scmp.lt.s32.totalorder %s14, 1
      %s144 = scalar_select %p143, %s14, 1
      %s145 = smul.addr %s144, 2
      %s146 = smul.addr %s145, 4
      %s147 = scalar_lea.vmem %s0, %s146
      %p148 = pneg %p35
      %p149 = pneg %p32
      %p150 = pneg %p56
      %p151 = pneg %p53
      %p152 = pneg %p77
      %p153 = pneg %p74
      %p154 = pneg %p103
      %p155 = pneg %p100
      %p156 = scmp.lt.s32.totalorder %s14, 1
      %s157 = scalar_select %p156, %s14, 1
      %s158 = smul.addr %s157, 2
      %s159 = smul.addr %s158, 8
      %s160 = scalar_lea.vmem %s3, %s159
      %p161 = scmp.lt.s32.totalorder %s14, 1
      %s162 = scalar_select %p161, %s14, 1
      %s163 = smul.addr %s162, 2
      %s164 = smul.addr %s163, 4
      %s165 = scalar_lea.vmem %s0, %s164
      %p166 = scmp.lt.s32.totalorder %s14, 1
      %s167 = scalar_select %p166, %s14, 1
      %s168 = smul.addr %s167, 2
      %s169 = smul.addr %s168, 8
      %s170 = scalar_lea.vmem %s3, %s169
      %171 = vst [vmem:[#allocation2 + $0x8] sm:$0xf] 0.0
      %v172 = vld [vmem:[%s2] sm:$0xff]
      %v173 = vld [vmem:[%s165] sm:$0xff]
      %174 = vst [vmem:[#allocation2] sm:$0xff] %v173
      %v175 = vld [vmem:[#allocation2] sm:$0xff]
      %v176 = vld [vmem:[%s1] sm:$0xff]
      %s177 = scalar_lea.vmem %s1, 8
      %v178 = vld [vmem:[%s177] sm:$0xff]
      %v180 = vcombine.high %v175, %v175
      %181 = vrot.lane.b32.xlu0 %v175, 127
      %v182 = vpop.permute.xlu0 %181
      %183 = vrot.lane.b32.xlu0 %v180, 127
      %v184 = vpop.permute.xlu0 %183
      %vm185 = vcmask 1039360
      %v186 = vsel %vm185, %v182, %v184
      %vm187 = vcmask 31744
      %v189 = vsel %vm187, %v178, 0
      %vm191 = vcmask 1043456
      %v192 = vsel %vm191, %v186, 0
      %v194 = vsel %vm191, %v184, 0
      %196 = vmatprep.subr.mxu0 0.0
      %197 = vmatpush1.msra.mxu0 0.0
      %198 = vmatprep.subr.mxu0 0.0
      %199 = vmatpush1.msra.mxu0 0.0
      %200 = vmatprep.subr.mxu0 0.0
      %201 = vmatpush1.msra.mxu0 0.0
      %202 = vmatprep.subr.mxu0 0.0
      %203 = vmatpush1.msra.mxu0 0.0
      %204 = vmatprep.subr.mxu0 0.0
      %205 = vmatpush1.msra.mxu0 0.0
      %206 = vmatprep.subr.mxu0 0.0
      %207 = vmatpush1.msra.mxu0 0.0
      %208 = vmatprep.subr.mxu0 0.0
      %209 = vmatpush1.msra.mxu0 0.0
      %210 = vmatprep.subr.mxu0 0.0
      %211 = vmatpush1.msra.mxu0 0.0
      %212 = vmatprep.subr.mxu0 0.0
      %213 = vmatpush1.msra.mxu0 0.0
      %214 = vmatprep.subr.mxu0 0.0
      %215 = vmatpush1.msra.mxu0 0.0
      %216 = vmatprep.subr.mxu0 0.0
      %217 = vmatpush1.msra.mxu0 0.0
      %218 = vmatprep.subr.mxu0 0.0
      %219 = vmatpush1.msra.mxu0 0.0
      %220 = vmatprep.subr.mxu0 0.0
      %221 = vmatpush1.msra.mxu0 0.0
      %222 = vmatprep.subr.mxu0 0.0
      %223 = vmatpush1.msra.mxu0 0.0
      %224 = vmatprep.subr.mxu0 0.0
      %225 = vmatpush1.msra.mxu0 0.0
      %226 = vmatprep.subr.mxu0 %v194
      %227 = vmatpush1.msra.mxu0 %v192
      %228 = vmatprep.subr.mxu0 0.0
      %229 = vmatpush2.msra.mxu0 0.0
      %230 = vmatprep.subr.mxu0 0.0
      %231 = vmatpush2.msra.mxu0 0.0
      %232 = vmatprep.subr.mxu0 0.0
      %233 = vmatpush2.msra.mxu0 0.0
      %234 = vmatprep.subr.mxu0 0.0
      %235 = vmatpush2.msra.mxu0 0.0
      %236 = vmatprep.subr.mxu0 0.0
      %237 = vmatpush2.msra.mxu0 0.0
      %238 = vmatprep.subr.mxu0 0.0
      %239 = vmatpush2.msra.mxu0 0.0
      %240 = vmatprep.subr.mxu0 0.0
      %241 = vmatpush2.msra.mxu0 0.0
      %242 = vmatprep.subr.mxu0 0.0
      %243 = vmatpush2.msra.mxu0 0.0
      %244 = vmatprep.subr.mxu0 0.0
      %245 = vmatpush2.msra.mxu0 0.0
      %246 = vmatprep.subr.mxu0 0.0
      %247 = vmatpush2.msra.mxu0 0.0
      %248 = vmatprep.subr.mxu0 0.0
      %249 = vmatpush2.msra.mxu0 0.0
      %250 = vmatprep.subr.mxu0 0.0
      %251 = vmatpush2.msra.mxu0 0.0
      %252 = vmatprep.subr.mxu0 0.0
      %253 = vmatpush2.msra.mxu0 0.0
      %254 = vmatprep.subr.mxu0 0.0
      %255 = vmatpush2.msra.mxu0 0.0
      %256 = vmatprep.subr.mxu0 0.0
      %257 = vmatpush2.msra.mxu0 0.0
      %258 = vmatprep.subr.mxu0 0.0
      %259 = vmatpush2.msra.mxu0 0.0
      %260 = vmatprep.mubr.f32.mxu0 0.0
      %261 = vmatmul.mubr.f32.gmra.mxu0 %v189
      %v262 = vpop.f32.mrf.mxu0
      %v263 = vadd.f32 0.0, %v262
      %v264 = vpop.f32.mrf.mxu0
      %v265 = vadd.f32 0.0, %v264
      %266 = vdwg.mxu0
      %v268 = vsel %vm187, %v176, 0
      %v270 = vsel %vm191, %v175, 0
      %v272 = vsel %vm191, %v180, 0
      %274 = vmatprep.subr.mxu0 0.0
      %275 = vmatpush1.msra.mxu0 0.0
      %276 = vmatprep.subr.mxu0 0.0
      %277 = vmatpush1.msra.mxu0 0.0
      %278 = vmatprep.subr.mxu0 0.0
      %279 = vmatpush1.msra.mxu0 0.0
      %280 = vmatprep.subr.mxu0 0.0
      %281 = vmatpush1.msra.mxu0 0.0
      %282 = vmatprep.subr.mxu0 0.0
      %283 = vmatpush1.msra.mxu0 0.0
      %284 = vmatprep.subr.mxu0 0.0
      %285 = vmatpush1.msra.mxu0 0.0
      %286 = vmatprep.subr.mxu0 0.0
      %287 = vmatpush1.msra.mxu0 0.0
      %288 = vmatprep.subr.mxu0 0.0
      %289 = vmatpush1.msra.mxu0 0.0
      %290 = vmatprep.subr.mxu0 0.0
      %291 = vmatpush1.msra.mxu0 0.0
      %292 = vmatprep.subr.mxu0 0.0
      %293 = vmatpush1.msra.mxu0 0.0
      %294 = vmatprep.subr.mxu0 0.0
      %295 = vmatpush1.msra.mxu0 0.0
      %296 = vmatprep.subr.mxu0 0.0
      %297 = vmatpush1.msra.mxu0 0.0
      %298 = vmatprep.subr.mxu0 0.0
      %299 = vmatpush1.msra.mxu0 0.0
      %300 = vmatprep.subr.mxu0 0.0
      %301 = vmatpush1.msra.mxu0 0.0
      %302 = vmatprep.subr.mxu0 0.0
      %303 = vmatpush1.msra.mxu0 0.0
      %304 = vmatprep.subr.mxu0 %v272
      %305 = vmatpush1.msra.mxu0 %v270
      %306 = vmatprep.subr.mxu0 0.0
      %307 = vmatpush2.msra.mxu0 0.0
      %308 = vmatprep.subr.mxu0 0.0
      %309 = vmatpush2.msra.mxu0 0.0
      %310 = vmatprep.subr.mxu0 0.0
      %311 = vmatpush2.msra.mxu0 0.0
      %312 = vmatprep.subr.mxu0 0.0
      %313 = vmatpush2.msra.mxu0 0.0
      %314 = vmatprep.subr.mxu0 0.0
      %315 = vmatpush2.msra.mxu0 0.0
      %316 = vmatprep.subr.mxu0 0.0
      %317 = vmatpush2.msra.mxu0 0.0
      %318 = vmatprep.subr.mxu0 0.0
      %319 = vmatpush2.msra.mxu0 0.0
      %320 = vmatprep.subr.mxu0 0.0
      %321 = vmatpush2.msra.mxu0 0.0
      %322 = vmatprep.subr.mxu0 0.0
      %323 = vmatpush2.msra.mxu0 0.0
      %324 = vmatprep.subr.mxu0 0.0
      %325 = vmatpush2.msra.mxu0 0.0
      %326 = vmatprep.subr.mxu0 0.0
      %327 = vmatpush2.msra.mxu0 0.0
      %328 = vmatprep.subr.mxu0 0.0
      %329 = vmatpush2.msra.mxu0 0.0
      %330 = vmatprep.subr.mxu0 0.0
      %331 = vmatpush2.msra.mxu0 0.0
      %332 = vmatprep.subr.mxu0 0.0
      %333 = vmatpush2.msra.mxu0 0.0
      %334 = vmatprep.subr.mxu0 0.0
      %335 = vmatpush2.msra.mxu0 0.0
      %336 = vmatprep.subr.mxu0 0.0
      %337 = vmatpush2.msra.mxu0 0.0
      %338 = vmatprep.mubr.f32.mxu0 0.0
      %339 = vmatmul.mubr.f32.gmra.mxu0 %v268
      %v340 = vpop.f32.mrf.mxu0
      %v341 = vadd.f32 %v263, %v340
      %v342 = vpop.f32.mrf.mxu0
      %v343 = vadd.f32 %v265, %v342
      %344 = vdwg.mxu0
      %v345 = vld [vmem:[#allocation2] sm:$0xff]
      %s346 = scalar_lea.vmem %s1, 16
      %v347 = vld [vmem:[%s346] sm:$0xff]
      %v349 = vcombine.high %v345, %v345
      %350 = vrot.lane.b32.xlu0 %v345, 126
      %v351 = vpop.permute.xlu0 %350
      %352 = vrot.lane.b32.xlu0 %v349, 126
      %v353 = vpop.permute.xlu0 %352
      %vm354 = vcmask 1031168
      %v355 = vsel %vm354, %v351, %v353
      %v357 = vsel %vm187, %v347, 0
      %v359 = vsel %vm191, %v355, 0
      %v361 = vsel %vm191, %v353, 0
      %363 = vmatprep.subr.mxu0 0.0
      %364 = vmatpush1.msra.mxu0 0.0
      %365 = vmatprep.subr.mxu0 0.0
      %366 = vmatpush1.msra.mxu0 0.0
      %367 = vmatprep.subr.mxu0 0.0
      %368 = vmatpush1.msra.mxu0 0.0
      %369 = vmatprep.subr.mxu0 0.0
      %370 = vmatpush1.msra.mxu0 0.0
      %371 = vmatprep.subr.mxu0 0.0
      %372 = vmatpush1.msra.mxu0 0.0
      %373 = vmatprep.subr.mxu0 0.0
      %374 = vmatpush1.msra.mxu0 0.0
      %375 = vmatprep.subr.mxu0 0.0
      %376 = vmatpush1.msra.mxu0 0.0
      %377 = vmatprep.subr.mxu0 0.0
      %378 = vmatpush1.msra.mxu0 0.0
      %379 = vmatprep.subr.mxu0 0.0
      %380 = vmatpush1.msra.mxu0 0.0
      %381 = vmatprep.subr.mxu0 0.0
      %382 = vmatpush1.msra.mxu0 0.0
      %383 = vmatprep.subr.mxu0 0.0
      %384 = vmatpush1.msra.mxu0 0.0
      %385 = vmatprep.subr.mxu0 0.0
      %386 = vmatpush1.msra.mxu0 0.0
      %387 = vmatprep.subr.mxu0 0.0
      %388 = vmatpush1.msra.mxu0 0.0
      %389 = vmatprep.subr.mxu0 0.0
      %390 = vmatpush1.msra.mxu0 0.0
      %391 = vmatprep.subr.mxu0 0.0
      %392 = vmatpush1.msra.mxu0 0.0
      %393 = vmatprep.subr.mxu0 %v361
      %394 = vmatpush1.msra.mxu0 %v359
      %395 = vmatprep.subr.mxu0 0.0
      %396 = vmatpush2.msra.mxu0 0.0
      %397 = vmatprep.subr.mxu0 0.0
      %398 = vmatpush2.msra.mxu0 0.0
      %399 = vmatprep.subr.mxu0 0.0
      %400 = vmatpush2.msra.mxu0 0.0
      %401 = vmatprep.subr.mxu0 0.0
      %402 = vmatpush2.msra.mxu0 0.0
      %403 = vmatprep.subr.mxu0 0.0
      %404 = vmatpush2.msra.mxu0 0.0
      %405 = vmatprep.subr.mxu0 0.0
      %406 = vmatpush2.msra.mxu0 0.0
      %407 = vmatprep.subr.mxu0 0.0
      %408 = vmatpush2.msra.mxu0 0.0
      %409 = vmatprep.subr.mxu0 0.0
      %410 = vmatpush2.msra.mxu0 0.0
      %411 = vmatprep.subr.mxu0 0.0
      %412 = vmatpush2.msra.mxu0 0.0
      %413 = vmatprep.subr.mxu0 0.0
      %414 = vmatpush2.msra.mxu0 0.0
      %415 = vmatprep.subr.mxu0 0.0
      %416 = vmatpush2.msra.mxu0 0.0
      %417 = vmatprep.subr.mxu0 0.0
      %418 = vmatpush2.msra.mxu0 0.0
      %419 = vmatprep.subr.mxu0 0.0
      %420 = vmatpush2.msra.mxu0 0.0
      %421 = vmatprep.subr.mxu0 0.0
      %422 = vmatpush2.msra.mxu0 0.0
      %423 = vmatprep.subr.mxu0 0.0
      %424 = vmatpush2.msra.mxu0 0.0
      %425 = vmatprep.subr.mxu0 0.0
      %426 = vmatpush2.msra.mxu0 0.0
      %427 = vmatprep.mubr.f32.mxu0 0.0
      %428 = vmatmul.mubr.f32.gmra.mxu0 %v357
      %v429 = vpop.f32.mrf.mxu0
      %v430 = vadd.f32 0.0, %v429
      %v431 = vpop.f32.mrf.mxu0
      %v432 = vadd.f32 0.0, %v431
      %433 = vdwg.mxu0
      %v434 = vadd.f32 %v341, %v430
      %v435 = vadd.f32 %v343, %v432
      %v436 = vld [vmem:[#allocation2] sm:$0xff]
      %s437 = scalar_lea.vmem %s1, 24
      %v438 = vld [vmem:[%s437] sm:$0xff]
      %v440 = vcombine.high %v436, %v436
      %441 = vrot.lane.b32.xlu0 %v436, 112
      %v442 = vpop.permute.xlu0 %441
      %443 = vrot.lane.b32.xlu0 %v440, 112
      %v444 = vpop.permute.xlu0 %443
      %vm445 = vcmask 916480
      %v446 = vsel %vm445, %v442, %v444
      %v448 = vsel %vm187, %v438, 0
      %v450 = vsel %vm191, %v446, 0
      %v452 = vsel %vm191, %v444, 0
      %454 = vmatprep.subr.mxu0 0.0
      %455 = vmatpush1.msra.mxu0 0.0
      %456 = vmatprep.subr.mxu0 0.0
      %457 = vmatpush1.msra.mxu0 0.0
      %458 = vmatprep.subr.mxu0 0.0
      %459 = vmatpush1.msra.mxu0 0.0
      %460 = vmatprep.subr.mxu0 0.0
      %461 = vmatpush1.msra.mxu0 0.0
      %462 = vmatprep.subr.mxu0 0.0
      %463 = vmatpush1.msra.mxu0 0.0
      %464 = vmatprep.subr.mxu0 0.0
      %465 = vmatpush1.msra.mxu0 0.0
      %466 = vmatprep.subr.mxu0 0.0
      %467 = vmatpush1.msra.mxu0 0.0
      %468 = vmatprep.subr.mxu0 0.0
      %469 = vmatpush1.msra.mxu0 0.0
      %470 = vmatprep.subr.mxu0 0.0
      %471 = vmatpush1.msra.mxu0 0.0
      %472 = vmatprep.subr.mxu0 0.0
      %473 = vmatpush1.msra.mxu0 0.0
      %474 = vmatprep.subr.mxu0 0.0
      %475 = vmatpush1.msra.mxu0 0.0
      %476 = vmatprep.subr.mxu0 0.0
      %477 = vmatpush1.msra.mxu0 0.0
      %478 = vmatprep.subr.mxu0 0.0
      %479 = vmatpush1.msra.mxu0 0.0
      %480 = vmatprep.subr.mxu0 0.0
      %481 = vmatpush1.msra.mxu0 0.0
      %482 = vmatprep.subr.mxu0 0.0
      %483 = vmatpush1.msra.mxu0 0.0
      %484 = vmatprep.subr.mxu0 %v452
      %485 = vmatpush1.msra.mxu0 %v450
      %486 = vmatprep.subr.mxu0 0.0
      %487 = vmatpush2.msra.mxu0 0.0
      %488 = vmatprep.subr.mxu0 0.0
      %489 = vmatpush2.msra.mxu0 0.0
      %490 = vmatprep.subr.mxu0 0.0
      %491 = vmatpush2.msra.mxu0 0.0
      %492 = vmatprep.subr.mxu0 0.0
      %493 = vmatpush2.msra.mxu0 0.0
      %494 = vmatprep.subr.mxu0 0.0
      %495 = vmatpush2.msra.mxu0 0.0
      %496 = vmatprep.subr.mxu0 0.0
      %497 = vmatpush2.msra.mxu0 0.0
      %498 = vmatprep.subr.mxu0 0.0
      %499 = vmatpush2.msra.mxu0 0.0
      %500 = vmatprep.subr.mxu0 0.0
      %501 = vmatpush2.msra.mxu0 0.0
      %502 = vmatprep.subr.mxu0 0.0
      %503 = vmatpush2.msra.mxu0 0.0
      %504 = vmatprep.subr.mxu0 0.0
      %505 = vmatpush2.msra.mxu0 0.0
      %506 = vmatprep.subr.mxu0 0.0
      %507 = vmatpush2.msra.mxu0 0.0
      %508 = vmatprep.subr.mxu0 0.0
      %509 = vmatpush2.msra.mxu0 0.0
      %510 = vmatprep.subr.mxu0 0.0
      %511 = vmatpush2.msra.mxu0 0.0
      %512 = vmatprep.subr.mxu0 0.0
      %513 = vmatpush2.msra.mxu0 0.0
      %514 = vmatprep.subr.mxu0 0.0
      %515 = vmatpush2.msra.mxu0 0.0
      %516 = vmatprep.subr.mxu0 0.0
      %517 = vmatpush2.msra.mxu0 0.0
      %518 = vmatprep.mubr.f32.mxu0 0.0
      %519 = vmatmul.mubr.f32.gmra.mxu0 %v448
      %v520 = vpop.f32.mrf.mxu0
      %v521 = vadd.f32 0.0, %v520
      %v522 = vpop.f32.mrf.mxu0
      %v523 = vadd.f32 0.0, %v522
      %524 = vdwg.mxu0
      %v525 = vadd.f32 %v434, %v521
      %v526 = vadd.f32 %v435, %v523
      %v527 = vld [vmem:[#allocation2] sm:$0xff]
      %s528 = scalar_lea.vmem %s1, 32
      %v529 = vld [vmem:[%s528] sm:$0xff]
      %v531 = vcombine.high %v527, %v527
      %532 = vrot.lane.b32.xlu0 %v527, 111
      %v533 = vpop.permute.xlu0 %532
      %534 = vrot.lane.b32.xlu0 %v531, 111
      %v535 = vpop.permute.xlu0 %534
      %vm536 = vcmask 908288
      %v537 = vsel %vm536, %v533, %v535
      %v539 = vsel %vm187, %v529, 0
      %v541 = vsel %vm191, %v537, 0
      %v543 = vsel %vm191, %v535, 0
      %545 = vmatprep.subr.mxu0 0.0
      %546 = vmatpush1.msra.mxu0 0.0
      %547 = vmatprep.subr.mxu0 0.0
      %548 = vmatpush1.msra.mxu0 0.0
      %549 = vmatprep.subr.mxu0 0.0
      %550 = vmatpush1.msra.mxu0 0.0
      %551 = vmatprep.subr.mxu0 0.0
      %552 = vmatpush1.msra.mxu0 0.0
      %553 = vmatprep.subr.mxu0 0.0
      %554 = vmatpush1.msra.mxu0 0.0
      %555 = vmatprep.subr.mxu0 0.0
      %556 = vmatpush1.msra.mxu0 0.0
      %557 = vmatprep.subr.mxu0 0.0
      %558 = vmatpush1.msra.mxu0 0.0
      %559 = vmatprep.subr.mxu0 0.0
      %560 = vmatpush1.msra.mxu0 0.0
      %561 = vmatprep.subr.mxu0 0.0
      %562 = vmatpush1.msra.mxu0 0.0
      %563 = vmatprep.subr.mxu0 0.0
      %564 = vmatpush1.msra.mxu0 0.0
      %565 = vmatprep.subr.mxu0 0.0
      %566 = vmatpush1.msra.mxu0 0.0
      %567 = vmatprep.subr.mxu0 0.0
      %568 = vmatpush1.msra.mxu0 0.0
      %569 = vmatprep.subr.mxu0 0.0
      %570 = vmatpush1.msra.mxu0 0.0
      %571 = vmatprep.subr.mxu0 0.0
      %572 = vmatpush1.msra.mxu0 0.0
      %573 = vmatprep.subr.mxu0 0.0
      %574 = vmatpush1.msra.mxu0 0.0
      %575 = vmatprep.subr.mxu0 %v543
      %576 = vmatpush1.msra.mxu0 %v541
      %577 = vmatprep.subr.mxu0 0.0
      %578 = vmatpush2.msra.mxu0 0.0
      %579 = vmatprep.subr.mxu0 0.0
      %580 = vmatpush2.msra.mxu0 0.0
      %581 = vmatprep.subr.mxu0 0.0
      %582 = vmatpush2.msra.mxu0 0.0
      %583 = vmatprep.subr.mxu0 0.0
      %584 = vmatpush2.msra.mxu0 0.0
      %585 = vmatprep.subr.mxu0 0.0
      %586 = vmatpush2.msra.mxu0 0.0
      %587 = vmatprep.subr.mxu0 0.0
      %588 = vmatpush2.msra.mxu0 0.0
      %589 = vmatprep.subr.mxu0 0.0
      %590 = vmatpush2.msra.mxu0 0.0
      %591 = vmatprep.subr.mxu0 0.0
      %592 = vmatpush2.msra.mxu0 0.0
      %593 = vmatprep.subr.mxu0 0.0
      %594 = vmatpush2.msra.mxu0 0.0
      %595 = vmatprep.subr.mxu0 0.0
      %596 = vmatpush2.msra.mxu0 0.0
      %597 = vmatprep.subr.mxu0 0.0
      %598 = vmatpush2.msra.mxu0 0.0
      %599 = vmatprep.subr.mxu0 0.0
      %600 = vmatpush2.msra.mxu0 0.0
      %601 = vmatprep.subr.mxu0 0.0
      %602 = vmatpush2.msra.mxu0 0.0
      %603 = vmatprep.subr.mxu0 0.0
      %604 = vmatpush2.msra.mxu0 0.0
      %605 = vmatprep.subr.mxu0 0.0
      %606 = vmatpush2.msra.mxu0 0.0
      %607 = vmatprep.subr.mxu0 0.0
      %608 = vmatpush2.msra.mxu0 0.0
      %609 = vmatprep.mubr.f32.mxu0 0.0
      %610 = vmatmul.mubr.f32.gmra.mxu0 %v539
      %v611 = vpop.f32.mrf.mxu0
      %v612 = vadd.f32 0.0, %v611
      %v613 = vpop.f32.mrf.mxu0
      %v614 = vadd.f32 0.0, %v613
      %615 = vdwg.mxu0
      %v616 = vadd.f32 %v525, %v612
      %v617 = vadd.f32 %v526, %v614
      %v618 = vld [vmem:[#allocation2] sm:$0xff]
      %s619 = scalar_lea.vmem %s1, 40
      %v620 = vld [vmem:[%s619] sm:$0xff]
      %v622 = vcombine.high %v618, %v618
      %623 = vrot.lane.b32.xlu0 %v618, 110
      %v624 = vpop.permute.xlu0 %623
      %625 = vrot.lane.b32.xlu0 %v622, 110
      %v626 = vpop.permute.xlu0 %625
      %vm627 = vcmask 900096
      %v628 = vsel %vm627, %v624, %v626
      %v630 = vsel %vm187, %v620, 0
      %v632 = vsel %vm191, %v628, 0
      %v634 = vsel %vm191, %v626, 0
      %636 = vmatprep.subr.mxu0 0.0
      %637 = vmatpush1.msra.mxu0 0.0
      %638 = vmatprep.subr.mxu0 0.0
      %639 = vmatpush1.msra.mxu0 0.0
      %640 = vmatprep.subr.mxu0 0.0
      %641 = vmatpush1.msra.mxu0 0.0
      %642 = vmatprep.subr.mxu0 0.0
      %643 = vmatpush1.msra.mxu0 0.0
      %644 = vmatprep.subr.mxu0 0.0
      %645 = vmatpush1.msra.mxu0 0.0
      %646 = vmatprep.subr.mxu0 0.0
      %647 = vmatpush1.msra.mxu0 0.0
      %648 = vmatprep.subr.mxu0 0.0
      %649 = vmatpush1.msra.mxu0 0.0
      %650 = vmatprep.subr.mxu0 0.0
      %651 = vmatpush1.msra.mxu0 0.0
      %652 = vmatprep.subr.mxu0 0.0
      %653 = vmatpush1.msra.mxu0 0.0
      %654 = vmatprep.subr.mxu0 0.0
      %655 = vmatpush1.msra.mxu0 0.0
      %656 = vmatprep.subr.mxu0 0.0
      %657 = vmatpush1.msra.mxu0 0.0
      %658 = vmatprep.subr.mxu0 0.0
      %659 = vmatpush1.msra.mxu0 0.0
      %660 = vmatprep.subr.mxu0 0.0
      %661 = vmatpush1.msra.mxu0 0.0
      %662 = vmatprep.subr.mxu0 0.0
      %663 = vmatpush1.msra.mxu0 0.0
      %664 = vmatprep.subr.mxu0 0.0
      %665 = vmatpush1.msra.mxu0 0.0
      %666 = vmatprep.subr.mxu0 %v634
      %667 = vmatpush1.msra.mxu0 %v632
      %668 = vmatprep.subr.mxu0 0.0
      %669 = vmatpush2.msra.mxu0 0.0
      %670 = vmatprep.subr.mxu0 0.0
      %671 = vmatpush2.msra.mxu0 0.0
      %672 = vmatprep.subr.mxu0 0.0
      %673 = vmatpush2.msra.mxu0 0.0
      %674 = vmatprep.subr.mxu0 0.0
      %675 = vmatpush2.msra.mxu0 0.0
      %676 = vmatprep.subr.mxu0 0.0
      %677 = vmatpush2.msra.mxu0 0.0
      %678 = vmatprep.subr.mxu0 0.0
      %679 = vmatpush2.msra.mxu0 0.0
      %680 = vmatprep.subr.mxu0 0.0
      %681 = vmatpush2.msra.mxu0 0.0
      %682 = vmatprep.subr.mxu0 0.0
      %683 = vmatpush2.msra.mxu0 0.0
      %684 = vmatprep.subr.mxu0 0.0
      %685 = vmatpush2.msra.mxu0 0.0
      %686 = vmatprep.subr.mxu0 0.0
      %687 = vmatpush2.msra.mxu0 0.0
      %688 = vmatprep.subr.mxu0 0.0
      %689 = vmatpush2.msra.mxu0 0.0
      %690 = vmatprep.subr.mxu0 0.0
      %691 = vmatpush2.msra.mxu0 0.0
      %692 = vmatprep.subr.mxu0 0.0
      %693 = vmatpush2.msra.mxu0 0.0
      %694 = vmatprep.subr.mxu0 0.0
      %695 = vmatpush2.msra.mxu0 0.0
      %696 = vmatprep.subr.mxu0 0.0
      %697 = vmatpush2.msra.mxu0 0.0
      %698 = vmatprep.subr.mxu0 0.0
      %699 = vmatpush2.msra.mxu0 0.0
      %700 = vmatprep.mubr.f32.mxu0 0.0
      %701 = vmatmul.mubr.f32.gmra.mxu0 %v630
      %v702 = vpop.f32.mrf.mxu0
      %v703 = vadd.f32 0.0, %v702
      %v704 = vpop.f32.mrf.mxu0
      %v705 = vadd.f32 0.0, %v704
      %706 = vdwg.mxu0
      %v707 = vadd.f32 %v616, %v703
      %v708 = vadd.f32 %v617, %v705
      %v709 = vld [vmem:[#allocation2] sm:$0xff]
      %s710 = scalar_lea.vmem %s1, 48
      %v711 = vld [vmem:[%s710] sm:$0xff]
      %v713 = vcombine.high %v709, %v709
      %714 = vrot.lane.b32.xlu0 %v709, 96
      %v715 = vpop.permute.xlu0 %714
      %716 = vrot.lane.b32.xlu0 %v713, 96
      %v717 = vpop.permute.xlu0 %716
      %vm718 = vcmask 785408
      %v719 = vsel %vm718, %v715, %v717
      %v721 = vsel %vm187, %v711, 0
      %v723 = vsel %vm191, %v719, 0
      %v725 = vsel %vm191, %v717, 0
      %727 = vmatprep.subr.mxu0 0.0
      %728 = vmatpush1.msra.mxu0 0.0
      %729 = vmatprep.subr.mxu0 0.0
      %730 = vmatpush1.msra.mxu0 0.0
      %731 = vmatprep.subr.mxu0 0.0
      %732 = vmatpush1.msra.mxu0 0.0
      %733 = vmatprep.subr.mxu0 0.0
      %734 = vmatpush1.msra.mxu0 0.0
      %735 = vmatprep.subr.mxu0 0.0
      %736 = vmatpush1.msra.mxu0 0.0
      %737 = vmatprep.subr.mxu0 0.0
      %738 = vmatpush1.msra.mxu0 0.0
      %739 = vmatprep.subr.mxu0 0.0
      %740 = vmatpush1.msra.mxu0 0.0
      %741 = vmatprep.subr.mxu0 0.0
      %742 = vmatpush1.msra.mxu0 0.0
      %743 = vmatprep.subr.mxu0 0.0
      %744 = vmatpush1.msra.mxu0 0.0
      %745 = vmatprep.subr.mxu0 0.0
      %746 = vmatpush1.msra.mxu0 0.0
      %747 = vmatprep.subr.mxu0 0.0
      %748 = vmatpush1.msra.mxu0 0.0
      %749 = vmatprep.subr.mxu0 0.0
      %750 = vmatpush1.msra.mxu0 0.0
      %751 = vmatprep.subr.mxu0 0.0
      %752 = vmatpush1.msra.mxu0 0.0
      %753 = vmatprep.subr.mxu0 0.0
      %754 = vmatpush1.msra.mxu0 0.0
      %755 = vmatprep.subr.mxu0 0.0
      %756 = vmatpush1.msra.mxu0 0.0
      %757 = vmatprep.subr.mxu0 %v725
      %758 = vmatpush1.msra.mxu0 %v723
      %759 = vmatprep.subr.mxu0 0.0
      %760 = vmatpush2.msra.mxu0 0.0
      %761 = vmatprep.subr.mxu0 0.0
      %762 = vmatpush2.msra.mxu0 0.0
      %763 = vmatprep.subr.mxu0 0.0
      %764 = vmatpush2.msra.mxu0 0.0
      %765 = vmatprep.subr.mxu0 0.0
      %766 = vmatpush2.msra.mxu0 0.0
      %767 = vmatprep.subr.mxu0 0.0
      %768 = vmatpush2.msra.mxu0 0.0
      %769 = vmatprep.subr.mxu0 0.0
      %770 = vmatpush2.msra.mxu0 0.0
      %771 = vmatprep.subr.mxu0 0.0
      %772 = vmatpush2.msra.mxu0 0.0
      %773 = vmatprep.subr.mxu0 0.0
      %774 = vmatpush2.msra.mxu0 0.0
      %775 = vmatprep.subr.mxu0 0.0
      %776 = vmatpush2.msra.mxu0 0.0
      %777 = vmatprep.subr.mxu0 0.0
      %778 = vmatpush2.msra.mxu0 0.0
      %779 = vmatprep.subr.mxu0 0.0
      %780 = vmatpush2.msra.mxu0 0.0
      %781 = vmatprep.subr.mxu0 0.0
      %782 = vmatpush2.msra.mxu0 0.0
      %783 = vmatprep.subr.mxu0 0.0
      %784 = vmatpush2.msra.mxu0 0.0
      %785 = vmatprep.subr.mxu0 0.0
      %786 = vmatpush2.msra.mxu0 0.0
      %787 = vmatprep.subr.mxu0 0.0
      %788 = vmatpush2.msra.mxu0 0.0
      %789 = vmatprep.subr.mxu0 0.0
      %790 = vmatpush2.msra.mxu0 0.0
      %791 = vmatprep.mubr.f32.mxu0 0.0
      %792 = vmatmul.mubr.f32.gmra.mxu0 %v721
      %v793 = vpop.f32.mrf.mxu0
      %v794 = vadd.f32 0.0, %v793
      %v795 = vpop.f32.mrf.mxu0
      %v796 = vadd.f32 0.0, %v795
      %797 = vdwg.mxu0
      %v798 = vadd.f32 %v707, %v794
      %v799 = vadd.f32 %v708, %v796
      %v800 = vld [vmem:[#allocation2] sm:$0xff]
      %v801 = vld [vmem:[#allocation2 + $0x8] sm:$0xf]
      %s802 = scalar_lea.vmem %s1, 56
      %v803 = vld [vmem:[%s802] sm:$0xff]
      %v806 = vcombine.high %v800, %v800
      %807 = vrot.lane.b32.xlu0 %v800, 95
      %v808 = vpop.permute.xlu0 %807
      %809 = vrot.lane.b32.xlu0 %v806, 95
      %v810 = vpop.permute.xlu0 %809
      %811 = vrot.lane.b32.xlu0 %v801, 95
      %v812 = vpop.permute.xlu0 %811
      %vm813 = vcmask 777216
      %v814 = vsel %vm813, %v808, %v810
      %v815 = vsel %vm813, %v810, %v812
      %v817 = vsel %vm187, %v803, 0
      %v819 = vsel %vm191, %v814, 0
      %v821 = vsel %vm191, %v815, 0
      %823 = vmatprep.subr.mxu0 0.0
      %824 = vmatpush1.msra.mxu0 0.0
      %825 = vmatprep.subr.mxu0 0.0
      %826 = vmatpush1.msra.mxu0 0.0
      %827 = vmatprep.subr.mxu0 0.0
      %828 = vmatpush1.msra.mxu0 0.0
      %829 = vmatprep.subr.mxu0 0.0
      %830 = vmatpush1.msra.mxu0 0.0
      %831 = vmatprep.subr.mxu0 0.0
      %832 = vmatpush1.msra.mxu0 0.0
      %833 = vmatprep.subr.mxu0 0.0
      %834 = vmatpush1.msra.mxu0 0.0
      %835 = vmatprep.subr.mxu0 0.0
      %836 = vmatpush1.msra.mxu0 0.0
      %837 = vmatprep.subr.mxu0 0.0
      %838 = vmatpush1.msra.mxu0 0.0
      %839 = vmatprep.subr.mxu0 0.0
      %840 = vmatpush1.msra.mxu0 0.0
      %841 = vmatprep.subr.mxu0 0.0
      %842 = vmatpush1.msra.mxu0 0.0
      %843 = vmatprep.subr.mxu0 0.0
      %844 = vmatpush1.msra.mxu0 0.0
      %845 = vmatprep.subr.mxu0 0.0
      %846 = vmatpush1.msra.mxu0 0.0
      %847 = vmatprep.subr.mxu0 0.0
      %848 = vmatpush1.msra.mxu0 0.0
      %849 = vmatprep.subr.mxu0 0.0
      %850 = vmatpush1.msra.mxu0 0.0
      %851 = vmatprep.subr.mxu0 0.0
      %852 = vmatpush1.msra.mxu0 0.0
      %853 = vmatprep.subr.mxu0 %v821
      %854 = vmatpush1.msra.mxu0 %v819
      %855 = vmatprep.subr.mxu0 0.0
      %856 = vmatpush2.msra.mxu0 0.0
      %857 = vmatprep.subr.mxu0 0.0
      %858 = vmatpush2.msra.mxu0 0.0
      %859 = vmatprep.subr.mxu0 0.0
      %860 = vmatpush2.msra.mxu0 0.0
      %861 = vmatprep.subr.mxu0 0.0
      %862 = vmatpush2.msra.mxu0 0.0
      %863 = vmatprep.subr.mxu0 0.0
      %864 = vmatpush2.msra.mxu0 0.0
      %865 = vmatprep.subr.mxu0 0.0
      %866 = vmatpush2.msra.mxu0 0.0
      %867 = vmatprep.subr.mxu0 0.0
      %868 = vmatpush2.msra.mxu0 0.0
      %869 = vmatprep.subr.mxu0 0.0
      %870 = vmatpush2.msra.mxu0 0.0
      %871 = vmatprep.subr.mxu0 0.0
      %872 = vmatpush2.msra.mxu0 0.0
      %873 = vmatprep.subr.mxu0 0.0
      %874 = vmatpush2.msra.mxu0 0.0
      %875 = vmatprep.subr.mxu0 0.0
      %876 = vmatpush2.msra.mxu0 0.0
      %877 = vmatprep.subr.mxu0 0.0
      %878 = vmatpush2.msra.mxu0 0.0
      %879 = vmatprep.subr.mxu0 0.0
      %880 = vmatpush2.msra.mxu0 0.0
      %881 = vmatprep.subr.mxu0 0.0
      %882 = vmatpush2.msra.mxu0 0.0
      %883 = vmatprep.subr.mxu0 0.0
      %884 = vmatpush2.msra.mxu0 0.0
      %885 = vmatprep.subr.mxu0 0.0
      %886 = vmatpush2.msra.mxu0 0.0
      %887 = vmatprep.mubr.f32.mxu0 0.0
      %888 = vmatmul.mubr.f32.gmra.mxu0 %v817
      %v889 = vpop.f32.mrf.mxu0
      %v890 = vadd.f32 0.0, %v889
      %v891 = vpop.f32.mrf.mxu0
      %v892 = vadd.f32 0.0, %v891
      %893 = vdwg.mxu0
      %v894 = vadd.f32 %v798, %v890
      %v895 = vadd.f32 %v799, %v892
      %v896 = vld [vmem:[#allocation2] sm:$0xff]
      %v897 = vld [vmem:[#allocation2 + $0x8] sm:$0xf]
      %s898 = scalar_lea.vmem %s1, 64
      %v899 = vld [vmem:[%s898] sm:$0xff]
      %v902 = vcombine.high %v896, %v896
      %903 = vrot.lane.b32.xlu0 %v896, 94
      %v904 = vpop.permute.xlu0 %903
      %905 = vrot.lane.b32.xlu0 %v902, 94
      %v906 = vpop.permute.xlu0 %905
      %907 = vrot.lane.b32.xlu0 %v897, 94
      %v908 = vpop.permute.xlu0 %907
      %vm909 = vcmask 769024
      %v910 = vsel %vm909, %v904, %v906
      %v911 = vsel %vm909, %v906, %v908
      %v913 = vsel %vm187, %v899, 0
      %v915 = vsel %vm191, %v910, 0
      %v917 = vsel %vm191, %v911, 0
      %919 = vmatprep.subr.mxu0 0.0
      %920 = vmatpush1.msra.mxu0 0.0
      %921 = vmatprep.subr.mxu0 0.0
      %922 = vmatpush1.msra.mxu0 0.0
      %923 = vmatprep.subr.mxu0 0.0
      %924 = vmatpush1.msra.mxu0 0.0
      %925 = vmatprep.subr.mxu0 0.0
      %926 = vmatpush1.msra.mxu0 0.0
      %927 = vmatprep.subr.mxu0 0.0
      %928 = vmatpush1.msra.mxu0 0.0
      %929 = vmatprep.subr.mxu0 0.0
      %930 = vmatpush1.msra.mxu0 0.0
      %931 = vmatprep.subr.mxu0 0.0
      %932 = vmatpush1.msra.mxu0 0.0
      %933 = vmatprep.subr.mxu0 0.0
      %934 = vmatpush1.msra.mxu0 0.0
      %935 = vmatprep.subr.mxu0 0.0
      %936 = vmatpush1.msra.mxu0 0.0
      %937 = vmatprep.subr.mxu0 0.0
      %938 = vmatpush1.msra.mxu0 0.0
      %939 = vmatprep.subr.mxu0 0.0
      %940 = vmatpush1.msra.mxu0 0.0
      %941 = vmatprep.subr.mxu0 0.0
      %942 = vmatpush1.msra.mxu0 0.0
      %943 = vmatprep.subr.mxu0 0.0
      %944 = vmatpush1.msra.mxu0 0.0
      %945 = vmatprep.subr.mxu0 0.0
      %946 = vmatpush1.msra.mxu0 0.0
      %947 = vmatprep.subr.mxu0 0.0
      %948 = vmatpush1.msra.mxu0 0.0
      %949 = vmatprep.subr.mxu0 %v917
      %950 = vmatpush1.msra.mxu0 %v915
      %951 = vmatprep.subr.mxu0 0.0
      %952 = vmatpush2.msra.mxu0 0.0
      %953 = vmatprep.subr.mxu0 0.0
      %954 = vmatpush2.msra.mxu0 0.0
      %955 = vmatprep.subr.mxu0 0.0
      %956 = vmatpush2.msra.mxu0 0.0
      %957 = vmatprep.subr.mxu0 0.0
      %958 = vmatpush2.msra.mxu0 0.0
      %959 = vmatprep.subr.mxu0 0.0
      %960 = vmatpush2.msra.mxu0 0.0
      %961 = vmatprep.subr.mxu0 0.0
      %962 = vmatpush2.msra.mxu0 0.0
      %963 = vmatprep.subr.mxu0 0.0
      %964 = vmatpush2.msra.mxu0 0.0
      %965 = vmatprep.subr.mxu0 0.0
      %966 = vmatpush2.msra.mxu0 0.0
      %967 = vmatprep.subr.mxu0 0.0
      %968 = vmatpush2.msra.mxu0 0.0
      %969 = vmatprep.subr.mxu0 0.0
      %970 = vmatpush2.msra.mxu0 0.0
      %971 = vmatprep.subr.mxu0 0.0
      %972 = vmatpush2.msra.mxu0 0.0
      %973 = vmatprep.subr.mxu0 0.0
      %974 = vmatpush2.msra.mxu0 0.0
      %975 = vmatprep.subr.mxu0 0.0
      %976 = vmatpush2.msra.mxu0 0.0
      %977 = vmatprep.subr.mxu0 0.0
      %978 = vmatpush2.msra.mxu0 0.0
      %979 = vmatprep.subr.mxu0 0.0
      %980 = vmatpush2.msra.mxu0 0.0
      %981 = vmatprep.subr.mxu0 0.0
      %982 = vmatpush2.msra.mxu0 0.0
      %983 = vmatprep.mubr.f32.mxu0 0.0
      %984 = vmatmul.mubr.f32.gmra.mxu0 %v913
      %v985 = vpop.f32.mrf.mxu0
      %v986 = vadd.f32 0.0, %v985
      %v987 = vpop.f32.mrf.mxu0
      %v988 = vadd.f32 0.0, %v987
      %989 = vdwg.mxu0
      %v990 = vadd.f32 %v894, %v986
      %v991 = vadd.f32 %v895, %v988
      %993 = vset.pattern.permute.xlu0 0
      %994 = vperm.xlu0 %993, %v172
      %v995 = vpop.permute.xlu0 %994
      %v997 = vadd.f32 %v990, %v995
      %v998 = vadd.f32 %v991, %v995
      %999 = vst [vmem:[%s170] sm:$0xff] %v997
      %1000 = vst.msk [vmem:[%s170 + $0x8] sm:$0xff] %vm718, %v998
      %p1001 = scmp.lt.s32.totalorder %s14, 1
      %s1002 = scalar_select %p1001, %s14, 1
      %s1003 = smul.addr %s1002, 2
      %s1004 = smul.addr %s1003, 8
      %s1005 = scalar_lea.vmem %s3, %s1004
      // Predicated region
      $region33: #{linear_cnn_forward.1} parent=31 // pred_check
        %p1006 = pneg %p100
      $region34: #{linear_cnn_forward.1} parent=31 // pred_check_branch
        %1008 = sbr.rel (%p1006) target = $region36
      $region35: #{linear_cnn_forward.1} parent=31 // pred_region
        _
      $region36: #{linear_cnn_forward.1} parent=31 // pred_fallthru
        _
    $region32: #{linear_cnn_forward.1} parent=5 // pred_fallthru
      _
    %p1009 = scmp.le.s32.totalorder 2, %s9
    // Predicated region
    $region37: #{linear_cnn_forward.1} parent=5 // pred_check
      %p1010 = pneg %p1009
    $region38: #{linear_cnn_forward.1} parent=5 // pred_check_branch
      %1012 = sbr.rel (%p1010) target = $region40
    $region39: #{linear_cnn_forward.1} parent=5 // pred_region
      %s1013 = ssub.s32 %s9, 2
      // Predicated region
      $region41: #{linear_cnn_forward.1} parent=39 // pred_check
        %p1014 = pneg %p106
      $region42: #{linear_cnn_forward.1} parent=39 // pred_check_branch
        %1016 = sbr.rel (%p1014) target = $region44
      $region43: #{linear_cnn_forward.1} parent=39 // pred_region
        %p1017 = scmp.lt.s32.totalorder %s15, 1
        %s1018 = scalar_select %p1017, %s15, 1
        %s1019 = smul.addr %s1018, 2
        %s1020 = smul.addr %s1019, 8
        %s1021 = scalar_lea.vmem %s3, %s1020
      $region44: #{linear_cnn_forward.1} parent=39 // pred_fallthru
        _
    $region40: #{linear_cnn_forward.1} parent=5 // pred_fallthru
      _
  $region6: #{linear_cnn_forward.1} parent=0 // loop_footer
    %s13 = sadd.s32 1, %s9
  $region7: #{linear_cnn_forward.1} parent=0 // loop_footer_branch
    %8 = sbr.rel target = $region3
  $region8: #{linear_cnn_forward.1} parent=0 // loop_exit
    _

</llo_original>
